<compile_context>
chip_gen: v7x
topology: tpu7x:2x2x1
jax: 0.10.0
libtpu: 0.0.40
codegen_flags: <defaults>
</compile_context>

<pallas_src>
import jax
import jax.numpy as jnp
from jax.experimental import pallas as pl
from jax.experimental.pallas import tpu as pltpu

# ---------------- synthetic BI_Enc_NER hyper-parameters (small) ----------------
B = 2            # batch size
SEQ_IN = 6       # incoming sequence length (forward pads it, cf. F.pad)
S = 8            # max_sequence_length
E = 32           # encoder hidden size (BERT last_hidden_state dim, stand-in)
H = 32           # hidden_size (projection dim)
L = 4            # max_entity_length
C = 4            # number of entity descriptions (= n_classes)
VOCAB = 64       # stand-in vocab for the synthetic token encoder
PAD_ID = 0       # pad_token_id
SCALE = 0.07     # CosSimilarity(scale=0.07): score = cosine(x, y) / scale
UNK_ID = C       # unk_entity_type_id
EPS = 1e-8       # cosine_similarity eps

N_SPANS = B * L * S      # 64 fused span rows

# Packed parameter slab row offsets (8-aligned so in-kernel static slices stay
# sublane-tile aligned). All parameter tensors are H(=E)=32 columns wide.
ENT_OFF = 0                      # ent_reps   (C rows)
LEN_OFF = 8                      # len_emb    (L rows)
WENT_OFF = 16                    # w_ent      (E rows)
BENT_OFF = WENT_OFF + E          # 48, b_ent  (1 row)
WSPAN_OFF = BENT_OFF + 8         # 56, w_span (2E+H rows)
BSPAN_OFF = WSPAN_OFF + 2 * E + H  # 152, b_span (1 row)
SLAB_ROWS = BSPAN_OFF + 8        # 160


def _bi_enc_ner_kernel(tok_ref, p_ref, score_ref):
    """Single-invocation kernel over the whole batch.

    tok_ref   : (B*S, E)        token representations, batch folded into sublanes
    p_ref     : (SLAB_ROWS, H)  packed parameter slab (one DMA)
    score_ref : (C, B*L*S)      scaled cosine scores; span axis (64) in lanes
    """
    tok = tok_ref[...]                                                # (B*S, E)

    ent_reps = p_ref[ENT_OFF:ENT_OFF + C, :]                          # (C, E)
    len_emb = p_ref[LEN_OFF:LEN_OFF + L, :]                           # (L, H)
    w_ent = p_ref[WENT_OFF:WENT_OFF + E, :]                           # (E, H)
    b_ent = p_ref[BENT_OFF:BENT_OFF + 1, :]                           # (1, H)
    w_start = p_ref[WSPAN_OFF:WSPAN_OFF + E, :]                       # (E, H)
    w_end = p_ref[WSPAN_OFF + E:WSPAN_OFF + 2 * E, :]                 # (E, H)
    w_len = p_ref[WSPAN_OFF + 2 * E:WSPAN_OFF + 2 * E + H, :]         # (H, H)
    b_span = p_ref[BSPAN_OFF:BSPAN_OFF + 1, :]                        # (1, H)

    # entity_projection(entity_representations)
    ent_proj = jnp.dot(ent_reps, w_ent,
                       preferred_element_type=jnp.float32) + b_ent    # (C, H)

    # Hoisted span-projection matmuls:
    #   concat([start, end, len]) @ W_span
    #     == start @ W_start + end @ W_end + len @ W_len (+ b_span, folded into start)
    start_proj = jnp.dot(tok, w_start,
                         preferred_element_type=jnp.float32) + b_span  # (B*S, H)
    end_proj = jnp.dot(tok, w_end,
                       preferred_element_type=jnp.float32)             # (B*S, H)
    len_proj = jnp.dot(len_emb, w_len,
                       preferred_element_type=jnp.float32)             # (L, H)

    # Build all B*L*S span representations.  The torch.roll(-shift) is applied
    # to the already-projected end reps, per batch block (no cross-batch wrap).
    blocks = []
    for b in range(B):
        sp = start_proj[b * S:(b + 1) * S, :]                          # (S, H)
        ep = end_proj[b * S:(b + 1) * S, :]                            # (S, H)
        for l in range(L):
            ep_l = ep if l == 0 else jnp.concatenate(
                [ep[l:, :], ep[:l, :]], axis=0)                        # roll by -l
            blocks.append(sp + ep_l + len_proj[l:l + 1, :])            # (S, H)
    span_all = jnp.concatenate(blocks, axis=0)                         # (B*L*S, H)

    # Scaled cosine similarity as ONE fused MXU matmul: pre-normalize rows with
    # EUP rsqrt and fold 1/SCALE into the entity side.  All math stays f32.
    inv_span = jax.lax.rsqrt(
        jnp.maximum(jnp.sum(span_all * span_all, axis=1, keepdims=True),
                    EPS * EPS))                                        # (B*L*S, 1)
    inv_ent = jax.lax.rsqrt(
        jnp.maximum(jnp.sum(ent_proj * ent_proj, axis=1, keepdims=True),
                    EPS * EPS))                                        # (C, 1)
    span_n = span_all * inv_span                                       # (B*L*S, H)
    ent_n = ent_proj * (inv_ent * (1.0 / SCALE))                       # (C, H)

    # (C, H) x (B*L*S, H)^T -> (C, B*L*S): lane-dense (64-wide) output store.
    score_ref[...] = jnp.einsum('ch,nh->cn', ent_n, span_n,
                                preferred_element_type=jnp.float32)


def _pack_param_slab(params):
    """Pack all parameter tensors into one (SLAB_ROWS, 32) f32 slab (one DMA)."""
    def _pad_rows(a, rows):
        return jnp.pad(a, ((0, rows - a.shape[0]), (0, 0)))
    return jnp.concatenate([
        _pad_rows(params["ent_reps"].astype(jnp.float32), LEN_OFF - ENT_OFF),
        _pad_rows(params["len_emb"].astype(jnp.float32), WENT_OFF - LEN_OFF),
        params["w_ent"].astype(jnp.float32),
        _pad_rows(params["b_ent"].astype(jnp.float32), WSPAN_OFF - BENT_OFF),
        params["w_span"].astype(jnp.float32),
        _pad_rows(params["b_span"].astype(jnp.float32), SLAB_ROWS - BSPAN_OFF),
    ], axis=0)


def bi_enc_ner_pallas(token_reps, slab):
    """Single pallas_call over the whole batch; returns scores (B, S, L, C)."""
    tok_flat = token_reps.reshape(B * S, E)
    scores_t = pl.pallas_call(
        _bi_enc_ner_kernel,
        out_shape=jax.ShapeDtypeStruct((C, N_SPANS), jnp.float32),
        grid=(1,),
        in_specs=[
            pl.BlockSpec((B * S, E), lambda i: (0, 0)),          # token reps
            pl.BlockSpec((SLAB_ROWS, H), lambda i: (0, 0)),      # packed params
        ],
        out_specs=pl.BlockSpec((C, N_SPANS), lambda i: (0, 0)),
        compiler_params=pltpu.CompilerParams(
            dimension_semantics=("arbitrary",)),
    )(tok_flat, slab)
    # (C, B*L*S) -> (B, S, L, C); wrapper-side layout plumbing is free.
    return scores_t.reshape(C, B, L, S).transpose(1, 3, 2, 0)


def bi_enc_ner_forward(input_ids, params):
    """Mirrors BI_Enc_NER.forward(input_ids, labels=None) -> predictions (B, S, L)."""
    seq = input_ids.shape[1]
    ids = jnp.pad(input_ids, ((0, 0), (0, S - seq)), constant_values=PAD_ID)
    # Synthetic stand-in for token_encoder(...).last_hidden_state
    token_reps = params["tok_emb"][ids]                                # (B, S, E)
    scores = bi_enc_ner_pallas(token_reps, _pack_param_slab(params))   # (B, S, L, C)

    # Threshold mask + argmax on the (tiny) scores in the wrapper: removes the
    # lane-sparse int32 output and the select-chain from the kernel.
    thr = scores[:, 0, 0].reshape(B, 1, 1, C)
    masked = jnp.where(scores > thr, scores, -jnp.inf)
    values = jnp.max(masked, axis=-1)
    preds = jnp.argmax(masked, axis=-1).astype(jnp.int32)
    preds = jnp.where(values == -jnp.inf, jnp.int32(UNK_ID), preds)
    # The torch module returns only `predictions` when labels is None; scores are
    # returned here additionally for validation in __main__.
    return preds, scores


def reference_forward(input_ids, params):
    """Pure-JAX reference following the torch code structure literally."""
    ids = jnp.pad(input_ids, ((0, 0), (0, S - input_ids.shape[1])),
                  constant_values=PAD_ID)
    tok = params["tok_emb"][ids]                                       # (B, S, E)
    ent_proj = params["ent_reps"] @ params["w_ent"] + params["b_ent"]  # (C, H)

    span_end = jnp.stack([jnp.roll(tok, -l, axis=1) for l in range(L)], axis=2)
    span_start = jnp.broadcast_to(tok[:, :, None, :], (B, S, L, E))
    len_emb = jnp.broadcast_to(params["len_emb"][None, None], (B, S, L, H))
    span = jnp.concatenate([span_start, span_end, len_emb], axis=-1)   # (B,S,L,2E+H)
    span_proj = span @ params["w_span"] + params["b_span"]             # (B, S, L, H)

    x = span_proj[..., None, :]                                        # (B,S,L,1,H)
    y = ent_proj.reshape(1, 1, 1, C, H)
    dots = jnp.sum(x * y, axis=-1)
    denom = jnp.maximum(jnp.linalg.norm(x, axis=-1) * jnp.linalg.norm(y, axis=-1), EPS)
    scores = dots / denom / SCALE                                      # (B, S, L, C)

    thr = scores[:, 0, 0].reshape(B, 1, 1, C)
    masked = jnp.where(scores > thr, scores, -jnp.inf)
    values = jnp.max(masked, axis=-1)
    preds = jnp.argmax(masked, axis=-1).astype(jnp.int32)
    preds = jnp.where(values == -jnp.inf, jnp.int32(UNK_ID), preds)
    return preds, scores


if __name__ == "__main__":
    key = jax.random.PRNGKey(0)
    ks = jax.random.split(key, 8)
    params = {
        # stand-in "encoders"
        "tok_emb": 0.5 * jax.random.normal(ks[0], (VOCAB, E), jnp.float32),
        "ent_reps": 0.5 * jax.random.normal(ks[1], (C, E), jnp.float32),
        # nn.Embedding(max_entity_length, hidden_size)
        "len_emb": 0.5 * jax.random.normal(ks[2], (L, H), jnp.float32),
        # Linear(encoder_hidden, hidden_size)  (stored as [in, out])
        "w_ent": jax.random.normal(ks[3], (E, H), jnp.float32) / jnp.sqrt(1.0 * E),
        "b_ent": 0.02 * jax.random.normal(ks[4], (1, H), jnp.float32),
        # Linear(encoder_hidden * 2 + hidden_size, hidden_size)
        "w_span": jax.random.normal(ks[5], (2 * E + H, H), jnp.float32) / jnp.sqrt(2.0 * E + H),
        "b_span": 0.02 * jax.random.normal(ks[6], (1, H), jnp.float32),
    }
    # distinct non-pad token ids (deterministic)
    input_ids = (jax.random.permutation(ks[7], jnp.arange(1, VOCAB))[: B * SEQ_IN]
                 .reshape(B, SEQ_IN).astype(jnp.int32))

    preds, scores = bi_enc_ner_forward(input_ids, params)
    jax.block_until_ready(preds)
    jax.block_until_ready(scores)

    preds_ref, scores_ref = reference_forward(input_ids, params)
    assert preds.shape == (B, S, L) and preds.dtype == jnp.int32
    assert jnp.allclose(scores, scores_ref, atol=1e-2, rtol=1e-3), "score mismatch"
    assert bool(jnp.all(preds == preds_ref)), "prediction mismatch"
    print("KERNEL_OK")
</pallas_src>

<mosaic_0001>
module attributes {stable_mosaic.version = 11 : i64} {
  func.func @_bi_enc_ner_kernel(%arg0: i32, %arg1: memref<16x32xf32, #tpu.memory_space<vmem>>, %arg2: memref<160x32xf32, #tpu.memory_space<vmem>>, %arg3: memref<4x64xf32, #tpu.memory_space<vmem>>) attributes {dimension_semantics = [#tpu.dimension_semantics<arbitrary>], iteration_bounds = array<i64: 1>, scalar_prefetch = 0 : i64, scratch_operands = 0 : i64, tpu.core_type = #tpu.core_type<tc>, window_params = [{pipeline_mode = #tpu.pipeline_mode<synchronous>, transform_indices = @transform_0, window_bounds = array<i64: 16, 32>}, {pipeline_mode = #tpu.pipeline_mode<synchronous>, transform_indices = @transform_1, window_bounds = array<i64: 160, 32>}, {pipeline_mode = #tpu.pipeline_mode<synchronous>, transform_indices = @transform_2, window_bounds = array<i64: 4, 64>}]} {
    %c0 = arith.constant 0 : index
    %c0_0 = arith.constant 0 : index
    %0 = vector.load %arg1[%c0, %c0_0] : memref<16x32xf32, #tpu.memory_space<vmem>>, vector<16x32xf32>
    %c0_1 = arith.constant 0 : index
    %c0_2 = arith.constant 0 : index
    %1 = vector.load %arg2[%c0_1, %c0_2] : memref<160x32xf32, #tpu.memory_space<vmem>>, vector<4x32xf32>
    %c8 = arith.constant 8 : index
    %c0_3 = arith.constant 0 : index
    %2 = vector.load %arg2[%c8, %c0_3] : memref<160x32xf32, #tpu.memory_space<vmem>>, vector<4x32xf32>
    %c16 = arith.constant 16 : index
    %c0_4 = arith.constant 0 : index
    %3 = vector.load %arg2[%c16, %c0_4] : memref<160x32xf32, #tpu.memory_space<vmem>>, vector<32x32xf32>
    %c48 = arith.constant 48 : index
    %c0_5 = arith.constant 0 : index
    %4 = vector.load %arg2[%c48, %c0_5] : memref<160x32xf32, #tpu.memory_space<vmem>>, vector<1x32xf32>
    %c56 = arith.constant 56 : index
    %c0_6 = arith.constant 0 : index
    %5 = vector.load %arg2[%c56, %c0_6] : memref<160x32xf32, #tpu.memory_space<vmem>>, vector<32x32xf32>
    %c88 = arith.constant 88 : index
    %c0_7 = arith.constant 0 : index
    %6 = vector.load %arg2[%c88, %c0_7] : memref<160x32xf32, #tpu.memory_space<vmem>>, vector<32x32xf32>
    %c120 = arith.constant 120 : index
    %c0_8 = arith.constant 0 : index
    %7 = vector.load %arg2[%c120, %c0_8] : memref<160x32xf32, #tpu.memory_space<vmem>>, vector<32x32xf32>
    %c152 = arith.constant 152 : index
    %c0_9 = arith.constant 0 : index
    %8 = vector.load %arg2[%c152, %c0_9] : memref<160x32xf32, #tpu.memory_space<vmem>>, vector<1x32xf32>
    %cst = arith.constant dense<0.000000e+00> : vector<4x32xf32>
    %9 = tpu.matmul %1, %3, %cst {dimension_numbers = #tpu.dot_dimension_numbers<[1], [0], [0], [1], [0, 0, 1, 1], [], []>} : vector<4x32xf32>, vector<32x32xf32>, vector<4x32xf32> -> vector<4x32xf32>
    %10 = vector.broadcast %4 : vector<1x32xf32> to vector<4x32xf32>
    %11 = arith.addf %9, %10 : vector<4x32xf32>
    %cst_10 = arith.constant dense<0.000000e+00> : vector<16x32xf32>
    %12 = tpu.matmul %0, %5, %cst_10 {dimension_numbers = #tpu.dot_dimension_numbers<[1], [0], [0], [1], [0, 0, 1, 1], [], []>} : vector<16x32xf32>, vector<32x32xf32>, vector<16x32xf32> -> vector<16x32xf32>
    %13 = vector.broadcast %8 : vector<1x32xf32> to vector<16x32xf32>
    %14 = arith.addf %12, %13 : vector<16x32xf32>
    %cst_11 = arith.constant dense<0.000000e+00> : vector<16x32xf32>
    %15 = tpu.matmul %0, %6, %cst_11 {dimension_numbers = #tpu.dot_dimension_numbers<[1], [0], [0], [1], [0, 0, 1, 1], [], []>} : vector<16x32xf32>, vector<32x32xf32>, vector<16x32xf32> -> vector<16x32xf32>
    %cst_12 = arith.constant dense<0.000000e+00> : vector<4x32xf32>
    %16 = tpu.matmul %2, %7, %cst_12 {dimension_numbers = #tpu.dot_dimension_numbers<[1], [0], [0], [1], [0, 0, 1, 1], [], []>} : vector<4x32xf32>, vector<32x32xf32>, vector<4x32xf32> -> vector<4x32xf32>
    %17 = vector.extract_strided_slice %14 {offsets = [0, 0], sizes = [8, 32], strides = [1, 1]} : vector<16x32xf32> to vector<8x32xf32>
    %18 = vector.extract_strided_slice %15 {offsets = [0, 0], sizes = [8, 32], strides = [1, 1]} : vector<16x32xf32> to vector<8x32xf32>
    %19 = arith.addf %17, %18 : vector<8x32xf32>
    %20 = vector.extract_strided_slice %16 {offsets = [0, 0], sizes = [1, 32], strides = [1, 1]} : vector<4x32xf32> to vector<1x32xf32>
    %21 = vector.broadcast %20 : vector<1x32xf32> to vector<8x32xf32>
    %22 = arith.addf %19, %21 : vector<8x32xf32>
    %23 = vector.extract_strided_slice %18 {offsets = [1, 0], sizes = [7, 32], strides = [1, 1]} : vector<8x32xf32> to vector<7x32xf32>
    %24 = vector.extract_strided_slice %18 {offsets = [0, 0], sizes = [1, 32], strides = [1, 1]} : vector<8x32xf32> to vector<1x32xf32>
    %25 = tpu.concatenate %23, %24 in 0 : vector<7x32xf32>, vector<1x32xf32> -> vector<8x32xf32>
    %26 = arith.addf %17, %25 : vector<8x32xf32>
    %27 = vector.extract_strided_slice %16 {offsets = [1, 0], sizes = [1, 32], strides = [1, 1]} : vector<4x32xf32> to vector<1x32xf32>
    %28 = vector.broadcast %27 : vector<1x32xf32> to vector<8x32xf32>
    %29 = arith.addf %26, %28 : vector<8x32xf32>
    %30 = vector.extract_strided_slice %18 {offsets = [2, 0], sizes = [6, 32], strides = [1, 1]} : vector<8x32xf32> to vector<6x32xf32>
    %31 = vector.extract_strided_slice %18 {offsets = [0, 0], sizes = [2, 32], strides = [1, 1]} : vector<8x32xf32> to vector<2x32xf32>
    %32 = tpu.concatenate %30, %31 in 0 : vector<6x32xf32>, vector<2x32xf32> -> vector<8x32xf32>
    %33 = arith.addf %17, %32 : vector<8x32xf32>
    %34 = vector.extract_strided_slice %16 {offsets = [2, 0], sizes = [1, 32], strides = [1, 1]} : vector<4x32xf32> to vector<1x32xf32>
    %35 = vector.broadcast %34 : vector<1x32xf32> to vector<8x32xf32>
    %36 = arith.addf %33, %35 : vector<8x32xf32>
    %37 = vector.extract_strided_slice %18 {offsets = [3, 0], sizes = [5, 32], strides = [1, 1]} : vector<8x32xf32> to vector<5x32xf32>
    %38 = vector.extract_strided_slice %18 {offsets = [0, 0], sizes = [3, 32], strides = [1, 1]} : vector<8x32xf32> to vector<3x32xf32>
    %39 = tpu.concatenate %37, %38 in 0 : vector<5x32xf32>, vector<3x32xf32> -> vector<8x32xf32>
    %40 = arith.addf %17, %39 : vector<8x32xf32>
    %41 = vector.extract_strided_slice %16 {offsets = [3, 0], sizes = [1, 32], strides = [1, 1]} : vector<4x32xf32> to vector<1x32xf32>
    %42 = vector.broadcast %41 : vector<1x32xf32> to vector<8x32xf32>
    %43 = arith.addf %40, %42 : vector<8x32xf32>
    %44 = vector.extract_strided_slice %14 {offsets = [8, 0], sizes = [8, 32], strides = [1, 1]} : vector<16x32xf32> to vector<8x32xf32>
    %45 = vector.extract_strided_slice %15 {offsets = [8, 0], sizes = [8, 32], strides = [1, 1]} : vector<16x32xf32> to vector<8x32xf32>
    %46 = arith.addf %44, %45 : vector<8x32xf32>
    %47 = vector.extract_strided_slice %16 {offsets = [0, 0], sizes = [1, 32], strides = [1, 1]} : vector<4x32xf32> to vector<1x32xf32>
    %48 = vector.broadcast %47 : vector<1x32xf32> to vector<8x32xf32>
    %49 = arith.addf %46, %48 : vector<8x32xf32>
    %50 = vector.extract_strided_slice %45 {offsets = [1, 0], sizes = [7, 32], strides = [1, 1]} : vector<8x32xf32> to vector<7x32xf32>
    %51 = vector.extract_strided_slice %45 {offsets = [0, 0], sizes = [1, 32], strides = [1, 1]} : vector<8x32xf32> to vector<1x32xf32>
    %52 = tpu.concatenate %50, %51 in 0 : vector<7x32xf32>, vector<1x32xf32> -> vector<8x32xf32>
    %53 = arith.addf %44, %52 : vector<8x32xf32>
    %54 = vector.extract_strided_slice %16 {offsets = [1, 0], sizes = [1, 32], strides = [1, 1]} : vector<4x32xf32> to vector<1x32xf32>
    %55 = vector.broadcast %54 : vector<1x32xf32> to vector<8x32xf32>
    %56 = arith.addf %53, %55 : vector<8x32xf32>
    %57 = vector.extract_strided_slice %45 {offsets = [2, 0], sizes = [6, 32], strides = [1, 1]} : vector<8x32xf32> to vector<6x32xf32>
    %58 = vector.extract_strided_slice %45 {offsets = [0, 0], sizes = [2, 32], strides = [1, 1]} : vector<8x32xf32> to vector<2x32xf32>
    %59 = tpu.concatenate %57, %58 in 0 : vector<6x32xf32>, vector<2x32xf32> -> vector<8x32xf32>
    %60 = arith.addf %44, %59 : vector<8x32xf32>
    %61 = vector.extract_strided_slice %16 {offsets = [2, 0], sizes = [1, 32], strides = [1, 1]} : vector<4x32xf32> to vector<1x32xf32>
    %62 = vector.broadcast %61 : vector<1x32xf32> to vector<8x32xf32>
    %63 = arith.addf %60, %62 : vector<8x32xf32>
    %64 = vector.extract_strided_slice %45 {offsets = [3, 0], sizes = [5, 32], strides = [1, 1]} : vector<8x32xf32> to vector<5x32xf32>
    %65 = vector.extract_strided_slice %45 {offsets = [0, 0], sizes = [3, 32], strides = [1, 1]} : vector<8x32xf32> to vector<3x32xf32>
    %66 = tpu.concatenate %64, %65 in 0 : vector<5x32xf32>, vector<3x32xf32> -> vector<8x32xf32>
    %67 = arith.addf %44, %66 : vector<8x32xf32>
    %68 = vector.extract_strided_slice %16 {offsets = [3, 0], sizes = [1, 32], strides = [1, 1]} : vector<4x32xf32> to vector<1x32xf32>
    %69 = vector.broadcast %68 : vector<1x32xf32> to vector<8x32xf32>
    %70 = arith.addf %67, %69 : vector<8x32xf32>
    %71 = tpu.concatenate %22, %29, %36, %43, %49, %56, %63, %70 in 0 : vector<8x32xf32>, vector<8x32xf32>, vector<8x32xf32>, vector<8x32xf32>, vector<8x32xf32>, vector<8x32xf32>, vector<8x32xf32>, vector<8x32xf32> -> vector<64x32xf32>
    %72 = arith.mulf %71, %71 : vector<64x32xf32>
    %cst_13 = arith.constant dense<0.000000e+00> : vector<64xf32>
    %73 = vector.multi_reduction <add>, %72, %cst_13 [1] : vector<64x32xf32> to vector<64xf32>
    %74 = vector.shape_cast %73 : vector<64xf32> to vector<64x1xf32>
    %cst_14 = arith.constant 1.000000e-16 : f32
    %75 = vector.broadcast %cst_14 : f32 to vector<64x1xf32>
    %76 = arith.maximumf %74, %75 : vector<64x1xf32>
    %77 = math.rsqrt %76 : vector<64x1xf32>
    %78 = arith.mulf %11, %11 : vector<4x32xf32>
    %cst_15 = arith.constant dense<0.000000e+00> : vector<4xf32>
    %79 = vector.multi_reduction <add>, %78, %cst_15 [1] : vector<4x32xf32> to vector<4xf32>
    %80 = vector.shape_cast %79 : vector<4xf32> to vector<4x1xf32>
    %cst_16 = arith.constant 1.000000e-16 : f32
    %81 = vector.broadcast %cst_16 : f32 to vector<4x1xf32>
    %82 = arith.maximumf %80, %81 : vector<4x1xf32>
    %83 = math.rsqrt %82 : vector<4x1xf32>
    %84 = vector.broadcast %77 : vector<64x1xf32> to vector<64x32xf32>
    %85 = arith.mulf %71, %84 : vector<64x32xf32>
    %cst_17 = arith.constant 14.2857141 : f32
    %86 = vector.broadcast %cst_17 : f32 to vector<4x1xf32>
    %87 = arith.mulf %83, %86 : vector<4x1xf32>
    %88 = vector.broadcast %87 : vector<4x1xf32> to vector<4x32xf32>
    %89 = arith.mulf %11, %88 : vector<4x32xf32>
    "tpu.trace_start"() <{level = 10 : i32, message = "ch,nh->cn"}> : () -> ()
    %cst_18 = arith.constant dense<0.000000e+00> : vector<4x64xf32>
    %90 = tpu.matmul %89, %85, %cst_18 {dimension_numbers = #tpu.dot_dimension_numbers<[1], [1], [0], [0], [0, 0, 1, 0], [], []>} : vector<4x32xf32>, vector<64x32xf32>, vector<4x64xf32> -> vector<4x64xf32>
    "tpu.trace_stop"() : () -> ()
    %c0_19 = arith.constant 0 : index
    %c0_20 = arith.constant 0 : index
    %91 = vector.load %arg3[%c0_19, %c0_20] : memref<4x64xf32, #tpu.memory_space<vmem>>, vector<4x64xf32>
    tpu.vector_store %arg3[%c0_19, %c0_20], %90 {strides = array<i32>} : memref<4x64xf32, #tpu.memory_space<vmem>>, vector<4x64xf32>,
    return
  }
  func.func @transform_0(%arg0: i32) -> (i32, i32) {
    %c0_i32 = arith.constant 0 : i32
    %c0_i32_0 = arith.constant 0 : i32
    %c0_i32_1 = arith.constant 0 : i32
    return %c0_i32, %c0_i32_0 : i32, i32
  }
  func.func @transform_1(%arg0: i32) -> (i32, i32) {
    %c0_i32 = arith.constant 0 : i32
    %c0_i32_0 = arith.constant 0 : i32
    %c0_i32_1 = arith.constant 0 : i32
    return %c0_i32, %c0_i32_0 : i32, i32
  }
  func.func @transform_2(%arg0: i32) -> (i32, i32) {
    %c0_i32 = arith.constant 0 : i32
    %c0_i32_0 = arith.constant 0 : i32
    %c0_i32_1 = arith.constant 0 : i32
    return %c0_i32, %c0_i32_0 : i32, i32
  }
}

</mosaic_0001>

<llo_original>
// kernel: tpu_custom_call.1
$region0: #{tpu_custom_call.1}
  #allocation0 [shape = 'u32[]', space=smem, size = 0x4, offset = 0x4, fixed_abs, tag = 'smem constant byte address 0x4 - core index']
  #allocation1 [shape = 'u32[144,128]{1,0:T(1,128)}', space=vmem, size = 0x12000, scoped, tag = 'internal scratch']
  %s0 = inlined_call_operand.vmem [shape: f32[16,32], index: 0, kind: input, shape index: {}]
  %s1 = inlined_call_operand.vmem [shape: f32[160,32], index: 1, kind: input, shape index: {}]
  %s2 = inlined_call_operand.hbm [shape: f32[4,64], index: 2, kind: output, shape index: {}]
  %s3 = sld [smem:[#allocation0]]
  $region18: #{tpu_custom_call.1} parent=0
    _
  %s5 = ssub.s32 1, %s3
  %s6 = scalar_select 0, %s5, %s3
  $region1: #{tpu_custom_call.1} parent=0
    #allocation2 [shape = 'u8[2048]{0}', space=vmem, size = 0x800, scoped, tag = 'output window, operand 0, single buffered']
    #allocation3 [shape = 's32[1]{0}', space=sflag, size = 0x4, scoped, tag = 'scoped memory for tpu_custom_call.1']
    %7 = vsyncpa [#allocation3], 0
    // Predicated region
    $region2: #{tpu_custom_call.1} parent=1 // pred_check
      _
    $region3: #{tpu_custom_call.1} parent=1 // pred_check_branch
      %9 = sbr.rel (0) target = $region5
    $region4: #{tpu_custom_call.1} parent=1 // pred_region
      _
    $region5: #{tpu_custom_call.1} parent=1 // pred_fallthru
      _
    // Predicated region
    $region6: #{tpu_custom_call.1} parent=1 // pred_check
      _
    $region7: #{tpu_custom_call.1} parent=1 // pred_check_branch
      %11 = sbr.rel (0) target = $region9
    $region8: #{tpu_custom_call.1} parent=1 // pred_region
      _
    $region9: #{tpu_custom_call.1} parent=1 // pred_fallthru
      _
    %v12 = vld [vmem:[%s0] sm:$0xff]
    %v13 = vld [vmem:[%s0 + $0x8] sm:$0xff]
    %v14 = vld [vmem:[%s1] sm:$0xf]
    %v15 = vld [vmem:[%s1 + $0x8] sm:$0xf]
    %v16 = vld [vmem:[%s1 + $0x10] sm:$0xff]
    %v17 = vld [vmem:[%s1 + $0x18] sm:$0xff]
    %v18 = vld [vmem:[%s1 + $0x20] sm:$0xff]
    %v19 = vld [vmem:[%s1 + $0x28] sm:$0xff]
    %v20 = vld [vmem:[%s1 + $0x30] sm:$0x1]
    %v21 = vld [vmem:[%s1 + $0x38] sm:$0xff]
    %v22 = vld [vmem:[%s1 + $0x40] sm:$0xff]
    %v23 = vld [vmem:[%s1 + $0x48] sm:$0xff]
    %v24 = vld [vmem:[%s1 + $0x50] sm:$0xff]
    %v25 = vld [vmem:[%s1 + $0x58] sm:$0xff]
    %v26 = vld [vmem:[%s1 + $0x60] sm:$0xff]
    %v27 = vld [vmem:[%s1 + $0x68] sm:$0xff]
    %v28 = vld [vmem:[%s1 + $0x70] sm:$0xff]
    %v29 = vld [vmem:[%s1 + $0x78] sm:$0xff]
    %v30 = vld [vmem:[%s1 + $0x80] sm:$0xff]
    %v31 = vld [vmem:[%s1 + $0x88] sm:$0xff]
    %v32 = vld [vmem:[%s1 + $0x90] sm:$0xff]
    %v33 = vld [vmem:[%s1 + $0x98] sm:$0x1]
    %v34 = vlaneseq
    %v35 = vshrl.u32 %v34, 7
    %v36 = vsub.s32 0, %v35
    %v37 = vrot.slane %v20, %v36
    %vm38 = vcmask 261120
    %v40 = vsel %vm38, %v14, 0
    %42 = vmatprep.subr.mxu0 0.0
    %43 = vmatpush1.msra.mxu0 %v16
    %44 = vmatprep.subr.mxu0 0.0
    %45 = vmatpush1.msra.mxu0 %v17
    %46 = vmatprep.subr.mxu0 0.0
    %47 = vmatpush1.msra.mxu0 %v18
    %48 = vmatprep.subr.mxu0 0.0
    %49 = vmatpush1.msra.mxu0 %v19
    %50 = vmatprep.subr.mxu0 0.0
    %51 = vmatpush1.msra.mxu0 0.0
    %52 = vmatprep.subr.mxu0 0.0
    %53 = vmatpush1.msra.mxu0 0.0
    %54 = vmatprep.subr.mxu0 0.0
    %55 = vmatpush1.msra.mxu0 0.0
    %56 = vmatprep.subr.mxu0 0.0
    %57 = vmatpush1.msra.mxu0 0.0
    %58 = vmatprep.subr.mxu0 0.0
    %59 = vmatpush1.msra.mxu0 0.0
    %60 = vmatprep.subr.mxu0 0.0
    %61 = vmatpush1.msra.mxu0 0.0
    %62 = vmatprep.subr.mxu0 0.0
    %63 = vmatpush1.msra.mxu0 0.0
    %64 = vmatprep.subr.mxu0 0.0
    %65 = vmatpush1.msra.mxu0 0.0
    %66 = vmatprep.subr.mxu0 0.0
    %67 = vmatpush1.msra.mxu0 0.0
    %68 = vmatprep.subr.mxu0 0.0
    %69 = vmatpush1.msra.mxu0 0.0
    %70 = vmatprep.subr.mxu0 0.0
    %71 = vmatpush1.msra.mxu0 0.0
    %72 = vmatprep.subr.mxu0 0.0
    %73 = vmatpush1.msra.mxu0 0.0
    %74 = vmatprep.subr.mxu0 0.0
    %75 = vmatpush1.msra.mxu0 0.0
    %76 = vmatprep.subr.mxu0 0.0
    %77 = vmatpush1.msra.mxu0 0.0
    %78 = vmatprep.subr.mxu0 0.0
    %79 = vmatpush1.msra.mxu0 0.0
    %80 = vmatprep.subr.mxu0 0.0
    %81 = vmatpush1.msra.mxu0 0.0
    %82 = vmatprep.subr.mxu0 0.0
    %83 = vmatpush1.msra.mxu0 0.0
    %84 = vmatprep.subr.mxu0 0.0
    %85 = vmatpush1.msra.mxu0 0.0
    %86 = vmatprep.subr.mxu0 0.0
    %87 = vmatpush1.msra.mxu0 0.0
    %88 = vmatprep.subr.mxu0 0.0
    %89 = vmatpush1.msra.mxu0 0.0
    %90 = vmatprep.subr.mxu0 0.0
    %91 = vmatpush1.msra.mxu0 0.0
    %92 = vmatprep.subr.mxu0 0.0
    %93 = vmatpush1.msra.mxu0 0.0
    %94 = vmatprep.subr.mxu0 0.0
    %95 = vmatpush1.msra.mxu0 0.0
    %96 = vmatprep.subr.mxu0 0.0
    %97 = vmatpush1.msra.mxu0 0.0
    %98 = vmatprep.subr.mxu0 0.0
    %99 = vmatpush1.msra.mxu0 0.0
    %100 = vmatprep.subr.mxu0 0.0
    %101 = vmatpush1.msra.mxu0 0.0
    %102 = vmatprep.subr.mxu0 0.0
    %103 = vmatpush1.msra.mxu0 0.0
    %104 = vmatprep.subr.mxu0 0.0
    %105 = vmatpush1.msra.mxu0 0.0
    %106 = vmatprep.mubr.f32.mxu0 0.0
    %107 = vmatmul.mubr.f32.gmra.mrb[0].mxu0 %v40
    %v108 = vpop.f32.mrb[0].mxu0
    %v109 = vadd.f32 %v37, %v108
    %v110 = vpop.f32.mrb[0].mxu0
    %111 = vdwg.mxu0
    %v112 = vlaneseq
    %v113 = vshrl.u32 %v112, 7
    %v114 = vsub.s32 0, %v113
    %v115 = vrot.slane %v33, %v114
    %v117 = vsel %vm38, %v12, 0
    %v120 = vsel %vm38, %v13, 0
    %122 = vmatprep.subr.mxu0 0.0
    %123 = vmatpush1.msra.mxu0 %v21
    %124 = vmatprep.subr.mxu0 0.0
    %125 = vmatpush1.msra.mxu0 %v22
    %126 = vmatprep.subr.mxu0 0.0
    %127 = vmatpush1.msra.mxu0 %v23
    %128 = vmatprep.subr.mxu0 0.0
    %129 = vmatpush1.msra.mxu0 %v24
    %130 = vmatprep.subr.mxu0 0.0
    %131 = vmatpush1.msra.mxu0 0.0
    %132 = vmatprep.subr.mxu0 0.0
    %133 = vmatpush1.msra.mxu0 0.0
    %134 = vmatprep.subr.mxu0 0.0
    %135 = vmatpush1.msra.mxu0 0.0
    %136 = vmatprep.subr.mxu0 0.0
    %137 = vmatpush1.msra.mxu0 0.0
    %138 = vmatprep.subr.mxu0 0.0
    %139 = vmatpush1.msra.mxu0 0.0
    %140 = vmatprep.subr.mxu0 0.0
    %141 = vmatpush1.msra.mxu0 0.0
    %142 = vmatprep.subr.mxu0 0.0
    %143 = vmatpush1.msra.mxu0 0.0
    %144 = vmatprep.subr.mxu0 0.0
    %145 = vmatpush1.msra.mxu0 0.0
    %146 = vmatprep.subr.mxu0 0.0
    %147 = vmatpush1.msra.mxu0 0.0
    %148 = vmatprep.subr.mxu0 0.0
    %149 = vmatpush1.msra.mxu0 0.0
    %150 = vmatprep.subr.mxu0 0.0
    %151 = vmatpush1.msra.mxu0 0.0
    %152 = vmatprep.subr.mxu0 0.0
    %153 = vmatpush1.msra.mxu0 0.0
    %154 = vmatprep.subr.mxu0 0.0
    %155 = vmatpush1.msra.mxu0 0.0
    %156 = vmatprep.subr.mxu0 0.0
    %157 = vmatpush1.msra.mxu0 0.0
    %158 = vmatprep.subr.mxu0 0.0
    %159 = vmatpush1.msra.mxu0 0.0
    %160 = vmatprep.subr.mxu0 0.0
    %161 = vmatpush1.msra.mxu0 0.0
    %162 = vmatprep.subr.mxu0 0.0
    %163 = vmatpush1.msra.mxu0 0.0
    %164 = vmatprep.subr.mxu0 0.0
    %165 = vmatpush1.msra.mxu0 0.0
    %166 = vmatprep.subr.mxu0 0.0
    %167 = vmatpush1.msra.mxu0 0.0
    %168 = vmatprep.subr.mxu0 0.0
    %169 = vmatpush1.msra.mxu0 0.0
    %170 = vmatprep.subr.mxu0 0.0
    %171 = vmatpush1.msra.mxu0 0.0
    %172 = vmatprep.subr.mxu0 0.0
    %173 = vmatpush1.msra.mxu0 0.0
    %174 = vmatprep.subr.mxu0 0.0
    %175 = vmatpush1.msra.mxu0 0.0
    %176 = vmatprep.subr.mxu0 0.0
    %177 = vmatpush1.msra.mxu0 0.0
    %178 = vmatprep.subr.mxu0 0.0
    %179 = vmatpush1.msra.mxu0 0.0
    %180 = vmatprep.subr.mxu0 0.0
    %181 = vmatpush1.msra.mxu0 0.0
    %182 = vmatprep.subr.mxu0 0.0
    %183 = vmatpush1.msra.mxu0 0.0
    %184 = vmatprep.subr.mxu0 0.0
    %185 = vmatpush1.msra.mxu0 0.0
    %186 = vmatprep.mubr.f32.mxu0 0.0
    %187 = vmatmul.mubr.f32.gmra.mrb[0].mxu0 %v117
    %v188 = vpop.f32.mrb[0].mxu0
    %v189 = vadd.f32 %v115, %v188
    %v190 = vpop.f32.mrb[0].mxu0
    %191 = vmatprep.mubr.f32.mxu0 0.0
    %192 = vmatmul.mubr.f32.gmra.mrb[0].mxu0 %v120
    %v193 = vpop.f32.mrb[0].mxu0
    %v194 = vadd.f32 %v115, %v193
    %v195 = vpop.f32.mrb[0].mxu0
    %196 = vdwg.mxu0
    %197 = vmatprep.subr.mxu0 0.0
    %198 = vmatpush1.msra.mxu0 %v25
    %199 = vmatprep.subr.mxu0 0.0
    %200 = vmatpush1.msra.mxu0 %v26
    %201 = vmatprep.subr.mxu0 0.0
    %202 = vmatpush1.msra.mxu0 %v27
    %203 = vmatprep.subr.mxu0 0.0
    %204 = vmatpush1.msra.mxu0 %v28
    %205 = vmatprep.subr.mxu0 0.0
    %206 = vmatpush1.msra.mxu0 0.0
    %207 = vmatprep.subr.mxu0 0.0
    %208 = vmatpush1.msra.mxu0 0.0
    %209 = vmatprep.subr.mxu0 0.0
    %210 = vmatpush1.msra.mxu0 0.0
    %211 = vmatprep.subr.mxu0 0.0
    %212 = vmatpush1.msra.mxu0 0.0
    %213 = vmatprep.subr.mxu0 0.0
    %214 = vmatpush1.msra.mxu0 0.0
    %215 = vmatprep.subr.mxu0 0.0
    %216 = vmatpush1.msra.mxu0 0.0
    %217 = vmatprep.subr.mxu0 0.0
    %218 = vmatpush1.msra.mxu0 0.0
    %219 = vmatprep.subr.mxu0 0.0
    %220 = vmatpush1.msra.mxu0 0.0
    %221 = vmatprep.subr.mxu0 0.0
    %222 = vmatpush1.msra.mxu0 0.0
    %223 = vmatprep.subr.mxu0 0.0
    %224 = vmatpush1.msra.mxu0 0.0
    %225 = vmatprep.subr.mxu0 0.0
    %226 = vmatpush1.msra.mxu0 0.0
    %227 = vmatprep.subr.mxu0 0.0
    %228 = vmatpush1.msra.mxu0 0.0
    %229 = vmatprep.subr.mxu0 0.0
    %230 = vmatpush1.msra.mxu0 0.0
    %231 = vmatprep.subr.mxu0 0.0
    %232 = vmatpush1.msra.mxu0 0.0
    %233 = vmatprep.subr.mxu0 0.0
    %234 = vmatpush1.msra.mxu0 0.0
    %235 = vmatprep.subr.mxu0 0.0
    %236 = vmatpush1.msra.mxu0 0.0
    %237 = vmatprep.subr.mxu0 0.0
    %238 = vmatpush1.msra.mxu0 0.0
    %239 = vmatprep.subr.mxu0 0.0
    %240 = vmatpush1.msra.mxu0 0.0
    %241 = vmatprep.subr.mxu0 0.0
    %242 = vmatpush1.msra.mxu0 0.0
    %243 = vmatprep.subr.mxu0 0.0
    %244 = vmatpush1.msra.mxu0 0.0
    %245 = vmatprep.subr.mxu0 0.0
    %246 = vmatpush1.msra.mxu0 0.0
    %247 = vmatprep.subr.mxu0 0.0
    %248 = vmatpush1.msra.mxu0 0.0
    %249 = vmatprep.subr.mxu0 0.0
    %250 = vmatpush1.msra.mxu0 0.0
    %251 = vmatprep.subr.mxu0 0.0
    %252 = vmatpush1.msra.mxu0 0.0
    %253 = vmatprep.subr.mxu0 0.0
    %254 = vmatpush1.msra.mxu0 0.0
    %255 = vmatprep.subr.mxu0 0.0
    %256 = vmatpush1.msra.mxu0 0.0
    %257 = vmatprep.subr.mxu0 0.0
    %258 = vmatpush1.msra.mxu0 0.0
    %259 = vmatprep.subr.mxu0 0.0
    %260 = vmatpush1.msra.mxu0 0.0
    %261 = vmatprep.mubr.f32.mxu0 0.0
    %262 = vmatmul.mubr.f32.gmra.mrb[0].mxu0 %v117
    %v263 = vpop.f32.mrb[0].mxu0
    %v264 = vadd.f32 0.0, %v263
    %v265 = vpop.f32.mrb[0].mxu0
    %266 = vmatprep.mubr.f32.mxu0 0.0
    %267 = vmatmul.mubr.f32.gmra.mrb[0].mxu0 %v120
    %v268 = vpop.f32.mrb[0].mxu0
    %v269 = vadd.f32 0.0, %v268
    %v270 = vpop.f32.mrb[0].mxu0
    %271 = vdwg.mxu0
    %v273 = vsel %vm38, %v15, 0
    %275 = vmatprep.subr.mxu0 0.0
    %276 = vmatpush1.msra.mxu0 %v29
    %277 = vmatprep.subr.mxu0 0.0
    %278 = vmatpush1.msra.mxu0 %v30
    %279 = vmatprep.subr.mxu0 0.0
    %280 = vmatpush1.msra.mxu0 %v31
    %281 = vmatprep.subr.mxu0 0.0
    %282 = vmatpush1.msra.mxu0 %v32
    %283 = vmatprep.subr.mxu0 0.0
    %284 = vmatpush1.msra.mxu0 0.0
    %285 = vmatprep.subr.mxu0 0.0
    %286 = vmatpush1.msra.mxu0 0.0
    %287 = vmatprep.subr.mxu0 0.0
    %288 = vmatpush1.msra.mxu0 0.0
    %289 = vmatprep.subr.mxu0 0.0
    %290 = vmatpush1.msra.mxu0 0.0
    %291 = vmatprep.subr.mxu0 0.0
    %292 = vmatpush1.msra.mxu0 0.0
    %293 = vmatprep.subr.mxu0 0.0
    %294 = vmatpush1.msra.mxu0 0.0
    %295 = vmatprep.subr.mxu0 0.0
    %296 = vmatpush1.msra.mxu0 0.0
    %297 = vmatprep.subr.mxu0 0.0
    %298 = vmatpush1.msra.mxu0 0.0
    %299 = vmatprep.subr.mxu0 0.0
    %300 = vmatpush1.msra.mxu0 0.0
    %301 = vmatprep.subr.mxu0 0.0
    %302 = vmatpush1.msra.mxu0 0.0
    %303 = vmatprep.subr.mxu0 0.0
    %304 = vmatpush1.msra.mxu0 0.0
    %305 = vmatprep.subr.mxu0 0.0
    %306 = vmatpush1.msra.mxu0 0.0
    %307 = vmatprep.subr.mxu0 0.0
    %308 = vmatpush1.msra.mxu0 0.0
    %309 = vmatprep.subr.mxu0 0.0
    %310 = vmatpush1.msra.mxu0 0.0
    %311 = vmatprep.subr.mxu0 0.0
    %312 = vmatpush1.msra.mxu0 0.0
    %313 = vmatprep.subr.mxu0 0.0
    %314 = vmatpush1.msra.mxu0 0.0
    %315 = vmatprep.subr.mxu0 0.0
    %316 = vmatpush1.msra.mxu0 0.0
    %317 = vmatprep.subr.mxu0 0.0
    %318 = vmatpush1.msra.mxu0 0.0
    %319 = vmatprep.subr.mxu0 0.0
    %320 = vmatpush1.msra.mxu0 0.0
    %321 = vmatprep.subr.mxu0 0.0
    %322 = vmatpush1.msra.mxu0 0.0
    %323 = vmatprep.subr.mxu0 0.0
    %324 = vmatpush1.msra.mxu0 0.0
    %325 = vmatprep.subr.mxu0 0.0
    %326 = vmatpush1.msra.mxu0 0.0
    %327 = vmatprep.subr.mxu0 0.0
    %328 = vmatpush1.msra.mxu0 0.0
    %329 = vmatprep.subr.mxu0 0.0
    %330 = vmatpush1.msra.mxu0 0.0
    %331 = vmatprep.subr.mxu0 0.0
    %332 = vmatpush1.msra.mxu0 0.0
    %333 = vmatprep.subr.mxu0 0.0
    %334 = vmatpush1.msra.mxu0 0.0
    %335 = vmatprep.subr.mxu0 0.0
    %336 = vmatpush1.msra.mxu0 0.0
    %337 = vmatprep.subr.mxu0 0.0
    %338 = vmatpush1.msra.mxu0 0.0
    %339 = vmatprep.mubr.f32.mxu0 0.0
    %340 = vmatmul.mubr.f32.gmra.mrb[0].mxu0 %v273
    %v341 = vpop.f32.mrb[0].mxu0
    %v342 = vadd.f32 0.0, %v341
    %v343 = vpop.f32.mrb[0].mxu0
    %344 = vdwg.mxu0
    %v345 = vadd.f32 %v189, %v264
    %v346 = vlaneseq
    %v347 = vshrl.u32 %v346, 7
    %v348 = vsub.s32 0, %v347
    %v349 = vrot.slane %v342, %v348
    %v350 = vadd.f32 %v345, %v349
    %v352 = vrot.slane %v264, 1
    %vm354 = vcmask 1046528
    %v355 = vsel %vm354, %v352, %v352
    %v356 = vadd.f32 %v189, %v355
    %v357 = vlaneseq
    %v358 = vshrl.u32 %v357, 7
    %v359 = vsub.s32 1, %v358
    %v360 = vrot.slane %v342, %v359
    %v361 = vadd.f32 %v356, %v360
    %v362 = vrot.slane %v264, 2
    %vm364 = vcmask 1045504
    %v365 = vsel %vm364, %v362, %v362
    %v366 = vadd.f32 %v189, %v365
    %v367 = vlaneseq
    %v368 = vshrl.u32 %v367, 7
    %v369 = vsub.s32 2, %v368
    %v370 = vrot.slane %v342, %v369
    %v371 = vadd.f32 %v366, %v370
    %v372 = vrot.slane %v264, 3
    %vm374 = vcmask 1044480
    %v375 = vsel %vm374, %v372, %v372
    %v376 = vadd.f32 %v189, %v375
    %v377 = vlaneseq
    %v378 = vshrl.u32 %v377, 7
    %v379 = vsub.s32 3, %v378
    %v380 = vrot.slane %v342, %v379
    %v381 = vadd.f32 %v376, %v380
    %v382 = vadd.f32 %v194, %v269
    %v383 = vadd.f32 %v382, %v349
    %v385 = vrot.slane %v269, 1
    %v387 = vsel %vm354, %v385, %v385
    %v388 = vadd.f32 %v194, %v387
    %v389 = vadd.f32 %v388, %v360
    %v390 = vrot.slane %v269, 2
    %v392 = vsel %vm364, %v390, %v390
    %v393 = vadd.f32 %v194, %v392
    %v394 = vadd.f32 %v393, %v370
    %v395 = vrot.slane %v269, 3
    %v397 = vsel %vm374, %v395, %v395
    %v398 = vadd.f32 %v194, %v397
    %v399 = vadd.f32 %v398, %v380
    %v400 = vmul.f32 %v350, %v350
    %v401 = vmul.f32 %v361, %v361
    %v402 = vmul.f32 %v371, %v371
    %v403 = vmul.f32 %v381, %v381
    %v404 = vmul.f32 %v383, %v383
    %v405 = vmul.f32 %v389, %v389
    %v406 = vmul.f32 %v394, %v394
    %v407 = vmul.f32 %v399, %v399
    %v408 = vsel %vm38, %v400, 0.0
    %409 = vadd.xlane.f32.xlu0 %v408
    %v410 = vpop.xlane.xlu0 %409
    %v411 = vsel %vm38, %v401, 0.0
    %412 = vadd.xlane.f32.xlu0 %v411
    %v413 = vpop.xlane.xlu0 %412
    %v414 = vsel %vm38, %v402, 0.0
    %415 = vadd.xlane.f32.xlu0 %v414
    %v416 = vpop.xlane.xlu0 %415
    %v417 = vsel %vm38, %v403, 0.0
    %418 = vadd.xlane.f32.xlu0 %v417
    %v419 = vpop.xlane.xlu0 %418
    %v420 = vsel %vm38, %v404, 0.0
    %421 = vadd.xlane.f32.xlu0 %v420
    %v422 = vpop.xlane.xlu0 %421
    %v423 = vsel %vm38, %v405, 0.0
    %424 = vadd.xlane.f32.xlu0 %v423
    %v425 = vpop.xlane.xlu0 %424
    %v426 = vsel %vm38, %v406, 0.0
    %427 = vadd.xlane.f32.xlu0 %v426
    %v428 = vpop.xlane.xlu0 %427
    %v429 = vsel %vm38, %v407, 0.0
    %430 = vadd.xlane.f32.xlu0 %v429
    %v431 = vpop.xlane.xlu0 %430
    %v432 = vmax.f32 %v410, 1e-16
    %v433 = vmax.f32 %v413, 1e-16
    %v434 = vmax.f32 %v416, 1e-16
    %v435 = vmax.f32 %v419, 1e-16
    %v436 = vmax.f32 %v422, 1e-16
    %v437 = vmax.f32 %v425, 1e-16
    %v438 = vmax.f32 %v428, 1e-16
    %v439 = vmax.f32 %v431, 1e-16
    %v440 = vrsqrt.pop %v432
    %v441 = vrsqrt.pop %v433
    %v442 = vrsqrt.pop %v434
    %v443 = vrsqrt.pop %v435
    %v444 = vrsqrt.pop %v436
    %v445 = vrsqrt.pop %v437
    %v446 = vrsqrt.pop %v438
    %v447 = vrsqrt.pop %v439
    %v448 = vmul.f32 %v109, %v109
    %vm449 = vcmask 257024
    %v450 = vsel %vm449, %v448, 0.0
    %451 = vadd.xlane.f32.xlu0 %v450
    %v452 = vpop.xlane.xlu0 %451
    %v453 = vmax.f32 %v452, 1e-16
    %v454 = vrsqrt.pop %v453
    %v455 = vmul.f32 %v350, %v440
    %v456 = vmul.f32 %v361, %v441
    %v457 = vmul.f32 %v371, %v442
    %v458 = vmul.f32 %v381, %v443
    %v459 = vmul.f32 %v383, %v444
    %v460 = vmul.f32 %v389, %v445
    %v461 = vmul.f32 %v394, %v446
    %v462 = vmul.f32 %v399, %v447
    %v463 = vmul.f32 %v454, 14.285714
    %v464 = vmul.f32 %v109, %v463
    %v466 = vsel %vm38, %v464, 0
    %v469 = vsel %vm38, %v455, 0
    %v472 = vsel %vm38, %v456, 0
    %v475 = vsel %vm38, %v457, 0
    %v478 = vsel %vm38, %v458, 0
    %v481 = vsel %vm38, %v459, 0
    %v484 = vsel %vm38, %v460, 0
    %v487 = vsel %vm38, %v461, 0
    %v490 = vsel %vm38, %v462, 0
    %492 = vmatprep.subr.mxu0 0.0
    %493 = vmatpush1.xpose.msra.mxu0 %v469
    %494 = vmatprep.subr.mxu0 0.0
    %495 = vmatpush1.xpose.msra.mxu0 %v472
    %496 = vmatprep.subr.mxu0 0.0
    %497 = vmatpush1.xpose.msra.mxu0 %v475
    %498 = vmatprep.subr.mxu0 0.0
    %499 = vmatpush1.xpose.msra.mxu0 %v478
    %500 = vmatprep.subr.mxu0 0.0
    %501 = vmatpush1.xpose.msra.mxu0 %v481
    %502 = vmatprep.subr.mxu0 0.0
    %503 = vmatpush1.xpose.msra.mxu0 %v484
    %504 = vmatprep.subr.mxu0 0.0
    %505 = vmatpush1.xpose.msra.mxu0 %v487
    %506 = vmatprep.subr.mxu0 0.0
    %507 = vmatpush1.xpose.msra.mxu0 %v490
    %508 = vmatprep.subr.mxu0 0.0
    %509 = vmatpush1.xpose.msra.mxu0 0.0
    %510 = vmatprep.subr.mxu0 0.0
    %511 = vmatpush1.xpose.msra.mxu0 0.0
    %512 = vmatprep.subr.mxu0 0.0
    %513 = vmatpush1.xpose.msra.mxu0 0.0
    %514 = vmatprep.subr.mxu0 0.0
    %515 = vmatpush1.xpose.msra.mxu0 0.0
    %516 = vmatprep.subr.mxu0 0.0
    %517 = vmatpush1.xpose.msra.mxu0 0.0
    %518 = vmatprep.subr.mxu0 0.0
    %519 = vmatpush1.xpose.msra.mxu0 0.0
    %520 = vmatprep.subr.mxu0 0.0
    %521 = vmatpush1.xpose.msra.mxu0 0.0
    %522 = vmatprep.subr.mxu0 0.0
    %523 = vmatpush1.xpose.msra.mxu0 0.0
    %524 = vmatprep.subr.mxu0 0.0
    %525 = vmatpush1.xpose.msra.mxu0 0.0
    %526 = vmatprep.subr.mxu0 0.0
    %527 = vmatpush1.xpose.msra.mxu0 0.0
    %528 = vmatprep.subr.mxu0 0.0
    %529 = vmatpush1.xpose.msra.mxu0 0.0
    %530 = vmatprep.subr.mxu0 0.0
    %531 = vmatpush1.xpose.msra.mxu0 0.0
    %532 = vmatprep.subr.mxu0 0.0
    %533 = vmatpush1.xpose.msra.mxu0 0.0
    %534 = vmatprep.subr.mxu0 0.0
    %535 = vmatpush1.xpose.msra.mxu0 0.0
    %536 = vmatprep.subr.mxu0 0.0
    %537 = vmatpush1.xpose.msra.mxu0 0.0
    %538 = vmatprep.subr.mxu0 0.0
    %539 = vmatpush1.xpose.msra.mxu0 0.0
    %540 = vmatprep.subr.mxu0 0.0
    %541 = vmatpush1.xpose.msra.mxu0 0.0
    %542 = vmatprep.subr.mxu0 0.0
    %543 = vmatpush1.xpose.msra.mxu0 0.0
    %544 = vmatprep.subr.mxu0 0.0
    %545 = vmatpush1.xpose.msra.mxu0 0.0
    %546 = vmatprep.subr.mxu0 0.0
    %547 = vmatpush1.xpose.msra.mxu0 0.0
    %548 = vmatprep.subr.mxu0 0.0
    %549 = vmatpush1.xpose.msra.mxu0 0.0
    %550 = vmatprep.subr.mxu0 0.0
    %551 = vmatpush1.xpose.msra.mxu0 0.0
    %552 = vmatprep.subr.mxu0 0.0
    %553 = vmatpush1.xpose.msra.mxu0 0.0
    %554 = vmatprep.subr.mxu0 0.0
    %555 = vmatpush1.xpose.msra.mxu0 0.0
    %556 = vmatprep.mubr.f32.mxu0 0.0
    %557 = vmatmul.mubr.f32.gmra.mrb[0].mxu0 %v466
    %v558 = vpop.f32.mrb[0].mxu0
    %v559 = vadd.f32 0.0, %v558
    %v560 = vpop.f32.mrb[0].mxu0
    %561 = vdwg.mxu0
    %vm562 = vcmask 519168
    %563 = vst.msk [vmem:[#allocation2] sm:$0xf] %vm562, %v559
    // Predicated region
    $region10: #{tpu_custom_call.1} parent=1 // pred_check
      _
    $region11: #{tpu_custom_call.1} parent=1 // pred_check_branch
      %565 = sbr.rel (0) target = $region13
    $region12: #{tpu_custom_call.1} parent=1 // pred_region
      %s567 = ssub.s32 64, 64
      %568 = vsyncadd [#allocation3], %s567
      %s570 = sshll.u32 [#allocation2], 4
      %s571 = int_to_ptr.vmem [resolvable:$true] %s570
      %573 = dma.vmem_to_hbm [thread:$0]  %s571, 64, %s2, [#allocation3]
    $region13: #{tpu_custom_call.1} parent=1 // pred_fallthru
      _
    // Predicated region
    $region14: #{tpu_custom_call.1} parent=1 // pred_check
      _
    $region15: #{tpu_custom_call.1} parent=1 // pred_check_branch
      %575 = sbr.rel (0) target = $region17
    $region16: #{tpu_custom_call.1} parent=1 // pred_region
      %576 = dma.done [#allocation3], 64
    $region17: #{tpu_custom_call.1} parent=1 // pred_fallthru
      _
    %577 = vsyncpa [#allocation3], 1

</llo_original>
